<compile_context>
chip_gen: v6e
topology: v6e:2x2x1
jax: 0.10.0
libtpu: 0.0.40
codegen_flags: <defaults>
</compile_context>

<pallas_src>
import jax
import jax.numpy as jnp
from jax import lax
from jax.experimental import pallas as pl
from jax.experimental.pallas import tpu as pltpu


# ---------------------------------------------------------------------------
# Hardware-aware helpers
# ---------------------------------------------------------------------------
_FALLBACK_VMEM_CAP = 64 * 1024 * 1024  # conservative (v7x-class) assumption


def _vmem_capacity_bytes() -> int:
    """Per-TensorCore VMEM capacity; falls back to the smallest (v7x) value."""
    try:
        info = pltpu.get_tpu_info()
        cap = getattr(info, "vmem_capacity_bytes", None)
        if cap:
            return int(cap)
    except Exception:
        pass
    return _FALLBACK_VMEM_CAP


def _vmem_limit_bytes() -> int:
    # Use at most half of physical VMEM (64 MiB on v5e/v6e, 32 MiB on v7x);
    # flash tiling keeps actual usage far below this anyway.
    return int(min(64 * 1024 * 1024, _vmem_capacity_bytes() // 2))


def _pick_tile(dim: int, candidates, max_full: int = 2048) -> int:
    """Largest candidate tile that evenly divides `dim`, else the full dim.

    Guarded: a non-divisible dimension larger than `max_full` raises instead of
    silently producing a VMEM-busting single tile.
    """
    for c in candidates:
        if dim % c == 0:
            return c
    if dim > max_full:
        raise ValueError(
            f"dim={dim} is not divisible by any tile in {candidates}; "
            "add a matching tile size (cdiv+mask path not implemented)."
        )
    return dim


def _attn_q_tile_candidates():
    # Cap tq on v7x-class parts (64 MiB VMEM); allow larger tiles on v5e/v6e.
    if _vmem_capacity_bytes() <= 64 * 1024 * 1024:
        return (256, 128)
    return (512, 256, 128)


# ---------------------------------------------------------------------------
# Kernels
# ---------------------------------------------------------------------------
def _linear_kernel(x_ref, w_ref, b_ref, o_ref, acc_ref):
    # x: (tm, tk), w: (tk, tn) (bf16 or f32), b: (1, tn) f32, o: (tm, tn).
    # Reduction over grid axis 2 with an f32 VMEM accumulator.
    k = pl.program_id(2)

    @pl.when(k == 0)
    def _():
        acc_ref[...] = jnp.zeros_like(acc_ref)

    acc_ref[...] += jnp.dot(
        x_ref[...], w_ref[...], preferred_element_type=jnp.float32
    )

    @pl.when(k == pl.num_programs(2) - 1)
    def _():
        o_ref[...] = (acc_ref[...] + b_ref[...]).astype(o_ref.dtype)


def _make_flash_attn_kernel(n_heads: int, head_dim: int, scale: float,
                            compute_dtype, approx_recip: bool):
    cdt = jnp.dtype(compute_dtype)

    def _attn_kernel(q_ref, k_ref, v_ref, o_ref, m_ref, l_ref, acc_ref):
        # q_ref: (tq, C), k_ref/v_ref: (tkv, C) lane-dense blocks.
        # m_ref/l_ref: (tq, H) f32 running max / sum; acc_ref: (tq, C) f32.
        kv = pl.program_id(2)

        @pl.when(kv == 0)
        def _():
            m_ref[...] = jnp.full_like(m_ref, -jnp.inf)
            l_ref[...] = jnp.zeros_like(l_ref)
            acc_ref[...] = jnp.zeros_like(acc_ref)

        for h in range(n_heads):
            sl = slice(h * head_dim, (h + 1) * head_dim)
            # Scale q (tq*D work, not tq*tkv); scale applied in f32, then cast.
            qh = (q_ref[:, sl].astype(jnp.float32) * scale).astype(cdt)
            kh = k_ref[:, sl]
            vh = v_ref[:, sl]

            # q @ k^T as a last-dim contraction (no transpose materialized).
            s = lax.dot_general(
                qh, kh,
                dimension_numbers=(((1,), (1,)), ((), ())),
                preferred_element_type=jnp.float32,
            )  # (tq, tkv) f32

            m_prev = m_ref[:, h:h + 1]
            l_prev = l_ref[:, h:h + 1]
            m_new = jnp.maximum(m_prev, jnp.max(s, axis=-1, keepdims=True))
            alpha = jnp.exp(m_prev - m_new)          # f32 EUP
            p = jnp.exp(s - m_new)                   # f32 EUP, single exp/elem

            l_ref[:, h:h + 1] = alpha * l_prev + jnp.sum(p, axis=-1, keepdims=True)
            m_ref[:, h:h + 1] = m_new
            # Unnormalized PV accumulation (normalization deferred to finalize).
            acc_ref[:, sl] = alpha * acc_ref[:, sl] + jnp.dot(
                p.astype(cdt), vh, preferred_element_type=jnp.float32
            )

        @pl.when(kv == pl.num_programs(2) - 1)
        def _():
            inv_l = pl.reciprocal(l_ref[...], approx=approx_recip)  # (tq, H)
            for h in range(n_heads):
                sl = slice(h * head_dim, (h + 1) * head_dim)
                acc_ref[:, sl] = acc_ref[:, sl] * inv_l[:, h:h + 1]
            # Single lane-dense (tq, C) output store.
            o_ref[...] = acc_ref[...].astype(o_ref.dtype)

    return _attn_kernel


# ---------------------------------------------------------------------------
# Pallas wrappers
# ---------------------------------------------------------------------------
def pallas_linear(x2d, w, b, out_dtype=None):
    """x2d: (M, K), w: (K, Nout), b: (Nout,) f32 -> (M, Nout). Tiled/pipelined."""
    M, K = x2d.shape
    Nout = w.shape[1]
    out_dtype = x2d.dtype if out_dtype is None else jnp.dtype(out_dtype)

    tm = _pick_tile(M, (512, 256, 128))
    tn = _pick_tile(Nout, (768, 512, 384, 256, 128))
    tk = _pick_tile(K, (512, 384, 256, 128))
    grid = (M // tm, Nout // tn, K // tk)

    in_itemsize = jnp.dtype(x2d.dtype).itemsize
    out_itemsize = jnp.dtype(out_dtype).itemsize

    return pl.pallas_call(
        _linear_kernel,
        out_shape=jax.ShapeDtypeStruct((M, Nout), out_dtype),
        grid=grid,
        in_specs=[
            pl.BlockSpec((tm, tk), lambda i, j, k: (i, k)),
            pl.BlockSpec((tk, tn), lambda i, j, k: (k, j)),
            pl.BlockSpec((1, tn), lambda i, j, k: (0, j)),
        ],
        out_specs=pl.BlockSpec((tm, tn), lambda i, j, k: (i, j)),
        scratch_shapes=[pltpu.VMEM((tm, tn), jnp.float32)],
        compiler_params=pltpu.CompilerParams(
            dimension_semantics=("parallel", "parallel", "arbitrary"),
            vmem_limit_bytes=_vmem_limit_bytes(),
        ),
        cost_estimate=pl.CostEstimate(
            flops=2 * M * Nout * K,
            transcendentals=0,
            bytes_accessed=(M * K + K * Nout) * in_itemsize
            + Nout * 4 + M * Nout * out_itemsize,
        ),
    )(x2d, w, b.reshape(1, Nout).astype(jnp.float32))


def pallas_attention(qkv, n_heads: int, head_dim: int, scale: float):
    """qkv: (B, N, 3, C) lane-dense projection layout -> (B, N, C).

    Flash-style: grid = (B, q tiles, kv tiles); KV axis is the innermost
    "arbitrary" axis; running stats + accumulator live in VMEM scratch.
    """
    B, N, three, C = qkv.shape
    assert three == 3 and C == n_heads * head_dim

    tq = _pick_tile(N, _attn_q_tile_candidates())
    tkv = _pick_tile(N, (512, 256, 128))
    n_q = N // tq
    n_kv = N // tkv
    in_itemsize = jnp.dtype(qkv.dtype).itemsize
    approx_recip = qkv.dtype == jnp.bfloat16

    q_spec = pl.BlockSpec(
        (pl.Squeezed(), tq, pl.Squeezed(), C), lambda b, qi, ki: (b, qi, 0, 0)
    )
    k_spec = pl.BlockSpec(
        (pl.Squeezed(), tkv, pl.Squeezed(), C), lambda b, qi, ki: (b, ki, 1, 0)
    )
    v_spec = pl.BlockSpec(
        (pl.Squeezed(), tkv, pl.Squeezed(), C), lambda b, qi, ki: (b, ki, 2, 0)
    )
    o_spec = pl.BlockSpec((pl.Squeezed(), tq, C), lambda b, qi, ki: (b, qi, 0))

    return pl.pallas_call(
        _make_flash_attn_kernel(n_heads, head_dim, scale, qkv.dtype, approx_recip),
        out_shape=jax.ShapeDtypeStruct((B, N, C), qkv.dtype),
        grid=(B, n_q, n_kv),
        in_specs=[q_spec, k_spec, v_spec],
        out_specs=o_spec,
        scratch_shapes=[
            pltpu.VMEM((tq, n_heads), jnp.float32),  # running max m
            pltpu.VMEM((tq, n_heads), jnp.float32),  # running sum l
            pltpu.VMEM((tq, C), jnp.float32),        # unnormalized output acc
        ],
        compiler_params=pltpu.CompilerParams(
            dimension_semantics=("parallel", "parallel", "arbitrary"),
            vmem_limit_bytes=_vmem_limit_bytes(),
        ),
        cost_estimate=pl.CostEstimate(
            flops=4 * B * n_heads * N * N * head_dim,
            transcendentals=B * n_heads * N * N,
            bytes_accessed=B * N * C * (1 + 2 * n_q) * in_itemsize
            + B * N * C * in_itemsize,
        ),
    )(qkv, qkv, qkv)


def multi_head_attention(x, params, n_heads: int, compute_dtype=jnp.bfloat16):
    """Forward pass equivalent to the PyTorch MultiHeadAttention module (eval).

    compute_dtype is the MXU operand dtype (bf16 fast path by default);
    all accumulation / softmax math stays in f32.
    """
    B, N, C = x.shape
    head_dim = C // n_heads
    scale = float(head_dim) ** -0.5
    cdt = jnp.dtype(compute_dtype)

    x2d = x.reshape(B * N, C).astype(cdt)
    qkv_w = params["qkv_w"].astype(cdt)
    proj_w = params["proj_w"].astype(cdt)

    # QKV projection (tiled Pallas matmul, f32 accumulation).
    qkv = pallas_linear(x2d, qkv_w, params["qkv_b"], out_dtype=cdt)
    # Free, contiguous reshape; heads stay packed lane-dense inside C.
    qkv = qkv.reshape(B, N, 3, C)

    # Flash multi-head softmax attention, output already merged to (B, N, C).
    o = pallas_attention(qkv, n_heads, head_dim, scale)

    # Output projection (tiled Pallas matmul), final result in x.dtype.
    out = pallas_linear(o.reshape(B * N, C), proj_w, params["proj_b"],
                        out_dtype=x.dtype)
    return out.reshape(B, N, C)


# ---------------------------------------------------------------------------
# Pure-JAX reference (for correctness check)
# ---------------------------------------------------------------------------
def reference(x, params, n_heads: int):
    B, N, C = x.shape
    head_dim = C // n_heads
    scale = float(head_dim) ** -0.5
    qkv = x.reshape(B * N, C) @ params["qkv_w"] + params["qkv_b"]
    qkv = qkv.reshape(B, N, 3, n_heads, head_dim).transpose(2, 0, 3, 1, 4)
    q, k, v = qkv[0], qkv[1], qkv[2]
    attn = jnp.einsum("bhqd,bhkd->bhqk", q, k) * scale
    attn = jax.nn.softmax(attn, axis=-1)
    o = jnp.einsum("bhqk,bhkd->bhqd", attn, v)
    o = o.transpose(0, 2, 1, 3).reshape(B * N, C)
    out = o @ params["proj_w"] + params["proj_b"]
    return out.reshape(B, N, C)


# ---------------------------------------------------------------------------
# Main
# ---------------------------------------------------------------------------
if __name__ == "__main__":
    # Small shapes consistent with the module: embed_dim divisible by n_heads.
    B, N, C = 2, 8, 32
    n_heads = 4

    key = jax.random.PRNGKey(0)
    kx, kqw, kqb, kpw, kpb = jax.random.split(key, 5)

    x = jax.random.normal(kx, (B, N, C), dtype=jnp.float32)

    # Deterministic parameter init (nn.Linear-like scale).
    params = {
        "qkv_w": jax.random.normal(kqw, (C, 3 * C), dtype=jnp.float32) * (C ** -0.5),
        "qkv_b": jax.random.normal(kqb, (3 * C,), dtype=jnp.float32) * 0.02,
        "proj_w": jax.random.normal(kpw, (C, C), dtype=jnp.float32) * (C ** -0.5),
        "proj_b": jax.random.normal(kpb, (C,), dtype=jnp.float32) * 0.02,
    }

    ref = reference(x, params, n_heads)

    # Fast path: bf16 MXU operands, f32 accumulation -> bf16-level tolerance.
    out_bf16 = jax.block_until_ready(multi_head_attention(x, params, n_heads))
    assert out_bf16.shape == (B, N, C)
    assert jnp.allclose(out_bf16, ref, atol=1e-1, rtol=1e-1), "bf16 path mismatch"

    # Strict path: full f32 operands -> tight tolerance vs reference.
    out_f32 = jax.block_until_ready(
        multi_head_attention(x, params, n_heads, compute_dtype=jnp.float32)
    )
    assert jnp.allclose(out_f32, ref, atol=1e-4, rtol=1e-4), "f32 path mismatch"

    print("KERNEL_OK")
</pallas_src>

<mosaic_0001>
module attributes {stable_mosaic.version = 11 : i64} {
  func.func @_linear_kernel(%arg0: i32, %arg1: i32, %arg2: i32, %arg3: memref<16x32xbf16, #tpu.memory_space<vmem>>, %arg4: memref<32x96xbf16, #tpu.memory_space<vmem>>, %arg5: memref<1x96xf32, #tpu.memory_space<vmem>>, %arg6: memref<16x96xbf16, #tpu.memory_space<vmem>>, %arg7: memref<16x96xf32, #tpu.memory_space<vmem>>) attributes {dimension_semantics = [#tpu.dimension_semantics<parallel>, #tpu.dimension_semantics<parallel>, #tpu.dimension_semantics<arbitrary>], iteration_bounds = array<i64: 1, 1, 1>, scalar_prefetch = 0 : i64, scratch_operands = 1 : i64, tpu.core_type = #tpu.core_type<tc>, window_params = [{transform_indices = @transform_0, window_bounds = array<i64: 16, 32>}, {transform_indices = @transform_1, window_bounds = array<i64: 32, 96>}, {transform_indices = @transform_2, window_bounds = array<i64: 1, 96>}, {transform_indices = @transform_3, window_bounds = array<i64: 16, 96>}]} {
    %c0_i32 = arith.constant 0 : i32
    %0 = arith.cmpi eq, %arg2, %c0_i32 : i32
    %1 = arith.extui %0 : i1 to i32
    %c0_i32_0 = arith.constant 0 : i32
    %2 = arith.cmpi ne, %1, %c0_i32_0 : i32
    scf.if %2 {
      %cst_10 = arith.constant 0.000000e+00 : f32
      %12 = vector.broadcast %cst_10 : f32 to vector<16x96xf32>
      %c0_11 = arith.constant 0 : index
      %c0_12 = arith.constant 0 : index
      %13 = vector.load %arg7[%c0_11, %c0_12] : memref<16x96xf32, #tpu.memory_space<vmem>>, vector<16x96xf32>
      tpu.vector_store %arg7[%c0_11, %c0_12], %12 {strides = array<i32>} : memref<16x96xf32, #tpu.memory_space<vmem>>, vector<16x96xf32>,
    } else {
    }
    %c0 = arith.constant 0 : index
    %c0_1 = arith.constant 0 : index
    %3 = vector.load %arg7[%c0, %c0_1] : memref<16x96xf32, #tpu.memory_space<vmem>>, vector<16x96xf32>
    %c0_2 = arith.constant 0 : index
    %c0_3 = arith.constant 0 : index
    %4 = vector.load %arg3[%c0_2, %c0_3] : memref<16x32xbf16, #tpu.memory_space<vmem>>, vector<16x32xbf16>
    %c0_4 = arith.constant 0 : index
    %c0_5 = arith.constant 0 : index
    %5 = vector.load %arg4[%c0_4, %c0_5] : memref<32x96xbf16, #tpu.memory_space<vmem>>, vector<32x96xbf16>
    %cst = arith.constant dense<0.000000e+00> : vector<16x96xf32>
    %6 = tpu.matmul %4, %5, %cst {dimension_numbers = #tpu.dot_dimension_numbers<[1], [0], [0], [1], [0, 0, 1, 1], [], []>} : vector<16x32xbf16>, vector<32x96xbf16>, vector<16x96xf32> -> vector<16x96xf32>
    %7 = arith.addf %3, %6 : vector<16x96xf32>
    %c0_6 = arith.constant 0 : index
    %c0_7 = arith.constant 0 : index
    %8 = vector.load %arg7[%c0_6, %c0_7] : memref<16x96xf32, #tpu.memory_space<vmem>>, vector<16x96xf32>
    tpu.vector_store %arg7[%c0_6, %c0_7], %7 {strides = array<i32>} : memref<16x96xf32, #tpu.memory_space<vmem>>, vector<16x96xf32>,
    %c0_i32_8 = arith.constant 0 : i32
    %9 = arith.cmpi eq, %arg2, %c0_i32_8 : i32
    %10 = arith.extui %9 : i1 to i32
    %c0_i32_9 = arith.constant 0 : i32
    %11 = arith.cmpi ne, %10, %c0_i32_9 : i32
    scf.if %11 {
      %c0_10 = arith.constant 0 : index
      %c0_11 = arith.constant 0 : index
      %12 = vector.load %arg7[%c0_10, %c0_11] : memref<16x96xf32, #tpu.memory_space<vmem>>, vector<16x96xf32>
      %c0_12 = arith.constant 0 : index
      %c0_13 = arith.constant 0 : index
      %13 = vector.load %arg5[%c0_12, %c0_13] : memref<1x96xf32, #tpu.memory_space<vmem>>, vector<1x96xf32>
      %14 = vector.broadcast %13 : vector<1x96xf32> to vector<16x96xf32>
      %15 = arith.addf %12, %14 : vector<16x96xf32>
      %16 = arith.truncf %15 : vector<16x96xf32> to vector<16x96xbf16>
      %c0_14 = arith.constant 0 : index
      %c0_15 = arith.constant 0 : index
      %17 = vector.load %arg6[%c0_14, %c0_15] : memref<16x96xbf16, #tpu.memory_space<vmem>>, vector<16x96xbf16>
      tpu.vector_store %arg6[%c0_14, %c0_15], %16 {strides = array<i32>} : memref<16x96xbf16, #tpu.memory_space<vmem>>, vector<16x96xbf16>,
    } else {
    }
    return
  }
  func.func @transform_0(%arg0: i32, %arg1: i32, %arg2: i32) -> (i32, i32) {
    %c0_i32 = arith.constant 0 : i32
    return %arg0, %arg2 : i32, i32
  }
  func.func @transform_1(%arg0: i32, %arg1: i32, %arg2: i32) -> (i32, i32) {
    %c0_i32 = arith.constant 0 : i32
    return %arg2, %arg1 : i32, i32
  }
  func.func @transform_2(%arg0: i32, %arg1: i32, %arg2: i32) -> (i32, i32) {
    %c0_i32 = arith.constant 0 : i32
    %c0_i32_0 = arith.constant 0 : i32
    return %c0_i32, %arg1 : i32, i32
  }
  func.func @transform_3(%arg0: i32, %arg1: i32, %arg2: i32) -> (i32, i32) {
    %c0_i32 = arith.constant 0 : i32
    return %arg0, %arg1 : i32, i32
  }
}

</mosaic_0001>

<llo_original>
// kernel: tpu_custom_call.1
$region0: #{tpu_custom_call.1}
  #allocation0 [shape = 'u32[]', space=smem, size = 0x4, offset = 0x4, fixed_abs, tag = 'smem constant byte address 0x4 - core index']
  #allocation1 [shape = 'u32[144,128]{1,0:T(1,128)}', space=vmem, size = 0x12000, scoped, tag = 'internal scratch']
  #allocation2 [shape = 'f32[16,96]{1,0:T(8,128)}', space=vmem, size = 0x2000, scoped, tag = 'scratch operand']
  %s0 = inlined_call_operand.hbm [shape: bf16[16,32], index: 0, kind: input, shape index: {}]
  %s1 = inlined_call_operand.hbm [shape: bf16[32,96], index: 1, kind: input, shape index: {}]
  %s2 = inlined_call_operand.vmem [shape: f32[1,96], index: 2, kind: input, shape index: {}]
  %s3 = inlined_call_operand.hbm [shape: bf16[16,96], index: 3, kind: output, shape index: {}]
  %s4 = sld [smem:[#allocation0]]
  $region38: #{tpu_custom_call.1} parent=0
    _
  %s6 = ssub.s32 1, %s4
  %s7 = scalar_select 0, %s6, %s4
  $region1: #{tpu_custom_call.1} parent=0
    #allocation3 [shape = 'u8[4096]{0}', space=vmem, size = 0x1000, scoped, tag = 'input window, operand 0, single buffered']
    #allocation4 [shape = 's32[1]{0}', space=sflag, size = 0x4, scoped, tag = 'scoped memory for tpu_custom_call.1']
    #allocation5 [shape = 's32[1]{0}', space=sflag, size = 0x4, scoped, tag = 'scoped memory for tpu_custom_call.1']
    #allocation6 [shape = 'u8[8192]{0}', space=vmem, size = 0x2000, scoped, tag = 'input window, operand 1, single buffered']
    #allocation7 [shape = 's32[1]{0}', space=sflag, size = 0x4, scoped, tag = 'scoped memory for tpu_custom_call.1']
    #allocation8 [shape = 'u8[4096]{0}', space=vmem, size = 0x1000, scoped, tag = 'output window, operand 0, single buffered']
    %8 = vsyncpa [#allocation4], 0
    %9 = vsyncpa [#allocation7], 0
    %10 = vsyncpa [#allocation5], 0
    // Predicated region
    $region2: #{tpu_custom_call.1} parent=1 // pred_check
      _
    $region3: #{tpu_custom_call.1} parent=1 // pred_check_branch
      %12 = sbr.rel (0) target = $region5
    $region4: #{tpu_custom_call.1} parent=1 // pred_region
      %s14 = ssub.s32 128, 128
      %15 = vsyncadd [#allocation4], %s14
      %s16 = sshll.u32 [#allocation3], 4
      %s17 = int_to_ptr.vmem [resolvable:$true] %s16
      %22 = dma.hbm_to_vmem [thread:$0]  %s0, 128, %s17, [#allocation4], 64, 64, 4
    $region5: #{tpu_custom_call.1} parent=1 // pred_fallthru
      _
    // Predicated region
    $region6: #{tpu_custom_call.1} parent=1 // pred_check
      _
    $region7: #{tpu_custom_call.1} parent=1 // pred_check_branch
      %24 = sbr.rel (0) target = $region9
    $region8: #{tpu_custom_call.1} parent=1 // pred_region
      %s26 = ssub.s32 256, 256
      %27 = vsyncadd [#allocation7], %s26
      %s28 = sshll.u32 [#allocation6], 4
      %s29 = int_to_ptr.vmem [resolvable:$true] %s28
      %34 = dma.hbm_to_vmem [thread:$0]  %s1, 256, %s29, [#allocation7], 64, 64, 4
    $region9: #{tpu_custom_call.1} parent=1 // pred_fallthru
      _
    // Predicated region
    $region10: #{tpu_custom_call.1} parent=1 // pred_check
      _
    $region11: #{tpu_custom_call.1} parent=1 // pred_check_branch
      %36 = sbr.rel (0) target = $region13
    $region12: #{tpu_custom_call.1} parent=1 // pred_region
      _
    $region13: #{tpu_custom_call.1} parent=1 // pred_fallthru
      _
    // Predicated region
    $region14: #{tpu_custom_call.1} parent=1 // pred_check
      _
    $region15: #{tpu_custom_call.1} parent=1 // pred_check_branch
      %38 = sbr.rel (0) target = $region17
    $region16: #{tpu_custom_call.1} parent=1 // pred_region
      %39 = dma.done [#allocation4], 128
    $region17: #{tpu_custom_call.1} parent=1 // pred_fallthru
      _
    // Predicated region
    $region18: #{tpu_custom_call.1} parent=1 // pred_check
      _
    $region19: #{tpu_custom_call.1} parent=1 // pred_check_branch
      %41 = sbr.rel (0) target = $region21
    $region20: #{tpu_custom_call.1} parent=1 // pred_region
      %42 = dma.done [#allocation7], 256
    $region21: #{tpu_custom_call.1} parent=1 // pred_fallthru
      _
    %p44 = scmp.eq.s32.totalorder 0, 0
    // Predicated region
    $region22: #{tpu_custom_call.1} parent=1 // pred_check
      %p45 = pneg %p44
    $region23: #{tpu_custom_call.1} parent=1 // pred_check_branch
      %47 = sbr.rel (%p45) target = $region25
    $region24: #{tpu_custom_call.1} parent=1 // pred_region
      %vm48 = vcmask 785408
      %49 = vst.msk [vmem:[#allocation2] sm:$0xff] %vm48, 0.0
      %50 = vst.msk [vmem:[#allocation2 + $0x8] sm:$0xff] %vm48, 0.0
    $region25: #{tpu_custom_call.1} parent=1 // pred_fallthru
      _
    %v51 = vld [vmem:[#allocation2] sm:$0xff]
    %v52 = vld [vmem:[#allocation2 + $0x8] sm:$0xff]
    %v53 = vld [vmem:[#allocation3] sm:$0xf]
    %v54 = vld [vmem:[#allocation3 + $0x4] sm:$0xf]
    %v55 = vld [vmem:[#allocation6] sm:$0xf]
    %v56 = vld [vmem:[#allocation6 + $0x4] sm:$0xf]
    %v57 = vld [vmem:[#allocation6 + $0x8] sm:$0xf]
    %v58 = vld [vmem:[#allocation6 + $0xc] sm:$0xf]
    %v61 = vunpack.c.l.b16 %v53
    %v62 = vunpack.c.l.b16 %v54
    %v63 = vpack.c.b16 %v62, %v61
    %v68 = vunpack.c.l.b16 %v55
    %v69 = vunpack.c.l.b16 %v56
    %v70 = vunpack.c.l.b16 %v57
    %v71 = vunpack.c.l.b16 %v58
    %v72 = vpack.c.b16 %v69, %v68
    %v73 = vpack.c.b16 %v71, %v70
    %vm76 = vcmask 261120
    %v78 = vsel %vm76, %v63, 0
    %80 = vmatprep.subr.bf16.mxu0 0
    %81 = vmatpush1.bf16.msra.mxu0 0
    %82 = vmatprep.subr.bf16.mxu0 0
    %83 = vmatpush1.bf16.msra.mxu0 0
    %84 = vmatprep.subr.bf16.mxu0 0
    %85 = vmatpush1.bf16.msra.mxu0 0
    %86 = vmatprep.subr.bf16.mxu0 0
    %87 = vmatpush1.bf16.msra.mxu0 0
    %88 = vmatprep.subr.bf16.mxu0 0
    %89 = vmatpush1.bf16.msra.mxu0 0
    %90 = vmatprep.subr.bf16.mxu0 0
    %91 = vmatpush1.bf16.msra.mxu0 0
    %92 = vmatprep.subr.bf16.mxu0 0
    %93 = vmatpush1.bf16.msra.mxu0 %v73
    %94 = vmatprep.subr.bf16.mxu0 0
    %95 = vmatpush1.bf16.msra.mxu0 %v72
    %96 = vmatprep.subr.bf16.mxu0 0
    %97 = vmatpush2.bf16.msra.mxu0 0
    %98 = vmatprep.subr.bf16.mxu0 0
    %99 = vmatpush2.bf16.msra.mxu0 0
    %100 = vmatprep.subr.bf16.mxu0 0
    %101 = vmatpush2.bf16.msra.mxu0 0
    %102 = vmatprep.subr.bf16.mxu0 0
    %103 = vmatpush2.bf16.msra.mxu0 0
    %104 = vmatprep.subr.bf16.mxu0 0
    %105 = vmatpush2.bf16.msra.mxu0 0
    %106 = vmatprep.subr.bf16.mxu0 0
    %107 = vmatpush2.bf16.msra.mxu0 0
    %108 = vmatprep.subr.bf16.mxu0 0
    %109 = vmatpush2.bf16.msra.mxu0 0
    %110 = vmatprep.subr.bf16.mxu0 0
    %111 = vmatpush2.bf16.msra.mxu0 0
    %112 = vmatprep.mubr.bf16.mxu0 0
    %113 = vmatmul.mubr.bf16.gmra.mxu0 %v78
    %v114 = vpop.f32.mrf.mxu0
    %v115 = vadd.f32 0.0, %v114
    %v116 = vpop.f32.mrf.mxu0
    %v117 = vpop.f32.mrf.mxu0
    %v118 = vadd.f32 0.0, %v117
    %v119 = vpop.f32.mrf.mxu0
    %120 = vdwg.mxu0
    %v121 = vadd.f32 %v51, %v115
    %v122 = vadd.f32 %v52, %v118
    %vm123 = vcmask 785408
    %124 = vst.msk [vmem:[#allocation2] sm:$0xff] %vm123, %v121
    %125 = vst.msk [vmem:[#allocation2 + $0x8] sm:$0xff] %vm123, %v122
    // Predicated region
    $region26: #{tpu_custom_call.1} parent=1 // pred_check
      %p126 = pneg %p44
    $region27: #{tpu_custom_call.1} parent=1 // pred_check_branch
      %128 = sbr.rel (%p126) target = $region29
    $region28: #{tpu_custom_call.1} parent=1 // pred_region
      %v129 = vld [vmem:[#allocation2] sm:$0xff]
      %v130 = vld [vmem:[#allocation2 + $0x8] sm:$0xff]
      %v131 = vld [vmem:[%s2] sm:$0x1]
      %v133 = vlaneseq
      %v134 = vshrl.u32 %v133, 7
      %v135 = vsub.s32 0, %v134
      %v136 = vrot.slane %v131, %v135
      %v138 = vadd.f32 %v129, %v136
      %v139 = vadd.f32 %v130, %v136
      %v140 = vpack.c.bf16 %v139, %v138
      %v142 = vunpack.c.l.b16 %v140
      %v143 = vunpack.c.h.b16 %v140
      %v144 = vpack.c.b16 %v142, %v142
      %v145 = vpack.c.b16 %v143, %v143
      %vm148 = vcmask 781312
      %149 = vst.msk [vmem:[#allocation8] sm:$0xf] %vm148, %v144
      %150 = vst.msk [vmem:[#allocation8 + $0x4] sm:$0xf] %vm148, %v145
    $region29: #{tpu_custom_call.1} parent=1 // pred_fallthru
      _
    // Predicated region
    $region30: #{tpu_custom_call.1} parent=1 // pred_check
      _
    $region31: #{tpu_custom_call.1} parent=1 // pred_check_branch
      %152 = sbr.rel (0) target = $region33
    $region32: #{tpu_custom_call.1} parent=1 // pred_region
      %s154 = ssub.s32 128, 128
      %155 = vsyncadd [#allocation5], %s154
      %s156 = sshll.u32 [#allocation8], 4
      %s157 = int_to_ptr.vmem [resolvable:$true] %s156
      %162 = dma.vmem_to_hbm [thread:$0]  %s157, 128, %s3, [#allocation5], 64, 64, 4
    $region33: #{tpu_custom_call.1} parent=1 // pred_fallthru
      _
    // Predicated region
    $region34: #{tpu_custom_call.1} parent=1 // pred_check
      _
    $region35: #{tpu_custom_call.1} parent=1 // pred_check_branch
      %164 = sbr.rel (0) target = $region37
    $region36: #{tpu_custom_call.1} parent=1 // pred_region
      %165 = dma.done [#allocation5], 128
    $region37: #{tpu_custom_call.1} parent=1 // pred_fallthru
      _
    %166 = vsyncpa [#allocation4], 1
    %167 = vsyncpa [#allocation7], 1
    %168 = vsyncpa [#allocation5], 1

</llo_original>
